<compile_context>
chip_gen: v7x
topology: tpu7x:2x2x1
jax: 0.10.0
libtpu: 0.0.40
codegen_flags: <defaults>
</compile_context>

<pallas_src>
import functools

import jax
import jax.numpy as jnp
from jax.experimental import pallas as pl
from jax.experimental.pallas import tpu as pltpu


def _pixel_body(score_ref, tgt_ref, loss_ref, prob_ref, cw_ref, ignore_label):
    """Per-pixel CE loss + true-class probability, classes on sublanes.

    score_ref: (C, TP)  logits block (any float dtype; cast to f32 here)
    tgt_ref:   (1, TP)  int32 labels block
    loss_ref:  (1, TP)  f32 out (0 where ignored)
    prob_ref:  (1, TP)  f32 out (+inf where ignored)
    cw_ref:    (C, 1)   f32 class weights, or None (unweighted path)
    """
    logits = score_ref[...].astype(jnp.float32)          # (C, TP)
    tgt = tgt_ref[...]                                    # (1, TP) int32
    c, tp = logits.shape

    class_id = jax.lax.broadcasted_iota(jnp.int32, (c, tp), 0)
    onehot = class_id == tgt                              # (C, TP) bool

    m = jnp.max(logits, axis=0, keepdims=True)            # (1, TP)
    z = logits - m
    s = jnp.sum(jnp.exp(z), axis=0, keepdims=True)        # (1, TP)
    log_s = jnp.log(s)
    z_t = jnp.sum(jnp.where(onehot, z, 0.0), axis=0, keepdims=True)

    ce = log_s - z_t                                      # -log_softmax[target]
    if cw_ref is not None:
        w_t = jnp.sum(jnp.where(onehot, cw_ref[...], 0.0), axis=0, keepdims=True)
        ce = ce * w_t
    p_t = jnp.exp(z_t - log_s)                            # softmax[target]

    valid = tgt != ignore_label
    loss_ref[...] = jnp.where(valid, ce, 0.0)
    prob_ref[...] = jnp.where(valid, p_t, jnp.inf)


def _pixel_kernel_nocw(score_ref, tgt_ref, loss_ref, prob_ref, *, ignore_label):
    _pixel_body(score_ref, tgt_ref, loss_ref, prob_ref, None, ignore_label)


def _pixel_kernel_cw(cw_ref, score_ref, tgt_ref, loss_ref, prob_ref, *, ignore_label):
    _pixel_body(score_ref, tgt_ref, loss_ref, prob_ref, cw_ref, ignore_label)


def ohem_cross_entropy(score, target, *, ignore_label=255, thresh=0.7,
                       min_kept=100000, loss_weight=1.0, class_weight=None,
                       block_pixels=4096):
    """Forward pass of OhemCrossEntropy. Returns a scalar f32 loss."""
    n, c, h, w = score.shape
    min_kept = max(1, int(min_kept))
    hw = h * w

    # Keep native dtype/layout; (N, C, H, W) -> (N, C, HW) is a free reshape.
    x = score.reshape(n, c, hw)
    t = target.reshape(n, hw).astype(jnp.int32)

    # Pixel tile: multiple of 128 lanes, as large as block_pixels allows.
    hw128 = int(pl.cdiv(hw, 128)) * 128
    tp = max(128, (min(int(block_pixels), hw128) // 128) * 128)
    hw_pad = int(pl.cdiv(hw, tp)) * tp
    if hw_pad != hw:
        x = jnp.pad(x, ((0, 0), (0, 0), (0, hw_pad - hw)))
        t = jnp.pad(t, ((0, 0), (0, hw_pad - hw)), constant_values=ignore_label)
    t3 = t.reshape(n, 1, hw_pad)

    nblk = hw_pad // tp
    grid = (n, nblk)

    use_cw = class_weight is not None
    in_specs = [
        pl.BlockSpec((None, c, tp), lambda b, p: (b, 0, p)),   # score -> (C, TP)
        pl.BlockSpec((None, 1, tp), lambda b, p: (b, 0, p)),   # target -> (1, TP)
    ]
    operands = [x, t3]
    if use_cw:
        cw = jnp.asarray(class_weight, jnp.float32).reshape(c, 1)
        in_specs = [pl.BlockSpec((c, 1), lambda b, p: (0, 0))] + in_specs
        operands = [cw] + operands
        kernel = functools.partial(_pixel_kernel_cw, ignore_label=ignore_label)
    else:
        kernel = functools.partial(_pixel_kernel_nocw, ignore_label=ignore_label)

    loss_px, prob_px = pl.pallas_call(
        kernel,
        out_shape=(jax.ShapeDtypeStruct((n, 1, hw_pad), jnp.float32),
                   jax.ShapeDtypeStruct((n, 1, hw_pad), jnp.float32)),
        grid=grid,
        in_specs=in_specs,
        out_specs=(pl.BlockSpec((None, 1, tp), lambda b, p: (b, 0, p)),
                   pl.BlockSpec((None, 1, tp), lambda b, p: (b, 0, p))),
        compiler_params=pltpu.CompilerParams(
            dimension_semantics=("parallel", "parallel")),
    )(*operands)

    loss_flat = loss_px.reshape(-1)
    prob_flat = prob_px.reshape(-1)
    p_pad = n * hw_pad

    valid = t.reshape(-1) != ignore_label      # padded pixels carry ignore_label
    num_valid = jnp.sum(valid.astype(jnp.int32))

    # k-th smallest valid probability via top_k on -prob (ignored/padded pixels
    # carry prob=+inf so they sort last).  Exact torch-.sort() semantics.
    # TODO(synk): for very large min_kept a histogram/bucket selection inside the
    # kernel would be faster still, but it is only bin-approximate.
    k_static = min(min_kept + 1, p_pad)
    neg_topk, _ = jax.lax.top_k(-prob_flat, k_static)
    idx = jnp.clip(jnp.minimum(jnp.int32(min_kept), num_valid - 1), 0, k_static - 1)
    min_value = -neg_topk[idx]
    threshold = jnp.maximum(min_value, jnp.float32(thresh))

    # Masked mean in plain JAX (XLA fuses this reduce at HBM roofline).
    kept = prob_flat < threshold
    kept_cnt = jnp.sum(kept.astype(jnp.float32))
    loss_sum = jnp.sum(jnp.where(kept, loss_flat, 0.0))
    mean_loss = jnp.where(kept_cnt > 0,
                          loss_sum / jnp.maximum(kept_cnt, 1.0),
                          jnp.float32(0.0))
    return jnp.where(num_valid > 0,
                     jnp.float32(loss_weight) * mean_loss,
                     jnp.float32(0.0))


def ohem_cross_entropy_ref(score, target, *, ignore_label=255, thresh=0.7,
                           min_kept=100000, loss_weight=1.0, class_weight=None):
    """Pure-JAX reference mirroring the PyTorch forward."""
    n, c, h, w = score.shape
    min_kept = max(1, int(min_kept))
    logits = jnp.transpose(score, (0, 2, 3, 1)).reshape(-1, c).astype(jnp.float32)
    t = target.reshape(-1).astype(jnp.int32)
    valid = t != ignore_label
    t0 = jnp.where(valid, t, 0)

    logp = jax.nn.log_softmax(logits, axis=-1)
    ce = -jnp.take_along_axis(logp, t0[:, None], axis=-1)[:, 0]
    if class_weight is not None:
        cw = jnp.asarray(class_weight, jnp.float32)
        ce = ce * jnp.take(cw, t0)
    ce = jnp.where(valid, ce, 0.0)
    prob = jnp.take_along_axis(jax.nn.softmax(logits, axis=-1), t0[:, None], axis=-1)[:, 0]
    prob = jnp.where(valid, prob, jnp.inf)

    num_valid = jnp.sum(valid.astype(jnp.int32))
    sorted_prob = jnp.sort(prob)
    k = jnp.clip(jnp.minimum(jnp.int32(min_kept), num_valid - 1), 0, prob.shape[0] - 1)
    threshold = jnp.maximum(jnp.take(sorted_prob, k), jnp.float32(thresh))
    kept = prob < threshold
    cnt = jnp.sum(kept.astype(jnp.float32))
    mean = jnp.where(cnt > 0,
                     jnp.sum(jnp.where(kept, ce, 0.0)) / jnp.maximum(cnt, 1.0),
                     jnp.float32(0.0))
    return jnp.where(num_valid > 0, jnp.float32(loss_weight) * mean, jnp.float32(0.0))


if __name__ == "__main__":
    key = jax.random.PRNGKey(0)
    k1, k2, k3 = jax.random.split(key, 3)

    N, C, H, W = 2, 19, 16, 16
    score = jax.random.normal(k1, (N, C, H, W), dtype=jnp.float32)
    target = jax.random.randint(k2, (N, H, W), 0, C, dtype=jnp.int32)
    ignore_mask = jax.random.uniform(k3, (N, H, W)) < 0.1
    target = jnp.where(ignore_mask, 255, target)

    cfg = dict(ignore_label=255, thresh=0.7, min_kept=200, loss_weight=1.0)

    def _close(a, b, tol=1e-3):
        return abs(float(a) - float(b)) <= tol * (1.0 + abs(float(b)))

    # 1) unweighted, f32 logits
    loss = jax.block_until_ready(ohem_cross_entropy(score, target, **cfg))
    ref = jax.block_until_ready(ohem_cross_entropy_ref(score, target, **cfg))
    assert _close(loss, ref), (float(loss), float(ref))

    # 2) class-weighted path
    cw = jnp.linspace(0.5, 1.5, C, dtype=jnp.float32)
    loss_w = jax.block_until_ready(
        ohem_cross_entropy(score, target, class_weight=cw, **cfg))
    ref_w = jax.block_until_ready(
        ohem_cross_entropy_ref(score, target, class_weight=cw, **cfg))
    assert _close(loss_w, ref_w), (float(loss_w), float(ref_w))

    # 3) bf16 logits straight from the network (no f32 up-cast in HBM)
    score_bf16 = score.astype(jnp.bfloat16)
    loss_b = jax.block_until_ready(ohem_cross_entropy(score_bf16, target, **cfg))
    ref_b = jax.block_until_ready(
        ohem_cross_entropy_ref(score_bf16.astype(jnp.float32), target, **cfg))
    assert _close(loss_b, ref_b, tol=2e-3), (float(loss_b), float(ref_b))

    print("KERNEL_OK")
</pallas_src>

<mosaic_0001>
module attributes {stable_mosaic.version = 11 : i64} {
  func.func @_pixel_kernel_nocw(%arg0: i32, %arg1: i32, %arg2: memref<1x19x256xf32, #tpu.memory_space<vmem>>, %arg3: memref<1x1x256xi32, #tpu.memory_space<vmem>>, %arg4: memref<1x1x256xf32, #tpu.memory_space<vmem>>, %arg5: memref<1x1x256xf32, #tpu.memory_space<vmem>>) attributes {dimension_semantics = [#tpu.dimension_semantics<parallel>, #tpu.dimension_semantics<parallel>], iteration_bounds = array<i64: 2, 1>, scalar_prefetch = 0 : i64, scratch_operands = 0 : i64, tpu.core_type = #tpu.core_type<tc>, window_params = [{transform_indices = @transform_0, window_bounds = array<i64: 1, 19, 256>}, {transform_indices = @transform_1, window_bounds = array<i64: 1, 1, 256>}, {transform_indices = @transform_2, window_bounds = array<i64: 1, 1, 256>}, {transform_indices = @transform_3, window_bounds = array<i64: 1, 1, 256>}]} {
    %c0 = arith.constant 0 : index
    %c0_0 = arith.constant 0 : index
    %c0_1 = arith.constant 0 : index
    %0 = vector.load %arg2[%c0, %c0_0, %c0_1] : memref<1x19x256xf32, #tpu.memory_space<vmem>>, vector<1x19x256xf32>
    %1 = vector.shape_cast %0 : vector<1x19x256xf32> to vector<19x256xf32>
    %c0_2 = arith.constant 0 : index
    %c0_3 = arith.constant 0 : index
    %c0_4 = arith.constant 0 : index
    %2 = vector.load %arg3[%c0_2, %c0_3, %c0_4] : memref<1x1x256xi32, #tpu.memory_space<vmem>>, vector<1x1x256xi32>
    %3 = vector.shape_cast %2 : vector<1x1x256xi32> to vector<1x256xi32>
    %4 = tpu.iota {dimensions = array<i32: 0>} : vector<19x256xi32>
    %5 = vector.broadcast %3 : vector<1x256xi32> to vector<19x256xi32>
    %6 = arith.cmpi eq, %4, %5 : vector<19x256xi32>
    %cst = arith.constant dense<0xFF800000> : vector<256xf32>
    %7 = vector.multi_reduction <maximumf>, %1, %cst [0] : vector<19x256xf32> to vector<256xf32>
    %8 = vector.shape_cast %7 : vector<256xf32> to vector<1x256xf32>
    %9 = vector.broadcast %8 : vector<1x256xf32> to vector<19x256xf32>
    %10 = arith.subf %1, %9 : vector<19x256xf32>
    %11 = math.exp %10 : vector<19x256xf32>
    %cst_5 = arith.constant dense<0.000000e+00> : vector<256xf32>
    %12 = vector.multi_reduction <add>, %11, %cst_5 [0] : vector<19x256xf32> to vector<256xf32>
    %13 = vector.shape_cast %12 : vector<256xf32> to vector<1x256xf32>
    %14 = math.log %13 : vector<1x256xf32>
    %cst_6 = arith.constant 0.000000e+00 : f32
    %15 = vector.broadcast %cst_6 : f32 to vector<19x256xf32>
    %16 = arith.select %6, %10, %15 : vector<19x256xi1>, vector<19x256xf32>
    %cst_7 = arith.constant dense<0.000000e+00> : vector<256xf32>
    %17 = vector.multi_reduction <add>, %16, %cst_7 [0] : vector<19x256xf32> to vector<256xf32>
    %18 = vector.shape_cast %17 : vector<256xf32> to vector<1x256xf32>
    %19 = arith.subf %14, %18 : vector<1x256xf32>
    %20 = arith.subf %18, %14 : vector<1x256xf32>
    %21 = math.exp %20 : vector<1x256xf32>
    %c255_i32 = arith.constant 255 : i32
    %22 = vector.broadcast %c255_i32 : i32 to vector<1x256xi32>
    %23 = arith.cmpi ne, %3, %22 : vector<1x256xi32>
    %cst_8 = arith.constant 0.000000e+00 : f32
    %24 = vector.broadcast %cst_8 : f32 to vector<1x256xf32>
    %25 = arith.select %23, %19, %24 : vector<1x256xi1>, vector<1x256xf32>
    %c0_9 = arith.constant 0 : index
    %c0_10 = arith.constant 0 : index
    %c0_11 = arith.constant 0 : index
    %26 = vector.load %arg4[%c0_9, %c0_10, %c0_11] : memref<1x1x256xf32, #tpu.memory_space<vmem>>, vector<1x1x256xf32>
    %27 = vector.shape_cast %26 : vector<1x1x256xf32> to vector<1x256xf32>
    %28 = vector.shape_cast %25 : vector<1x256xf32> to vector<1x1x256xf32>
    tpu.vector_store %arg4[%c0_9, %c0_10, %c0_11], %28 {strides = array<i32>} : memref<1x1x256xf32, #tpu.memory_space<vmem>>, vector<1x1x256xf32>,
    %cst_12 = arith.constant 0x7F800000 : f32
    %29 = vector.broadcast %cst_12 : f32 to vector<1x256xf32>
    %30 = arith.select %23, %21, %29 : vector<1x256xi1>, vector<1x256xf32>
    %c0_13 = arith.constant 0 : index
    %c0_14 = arith.constant 0 : index
    %c0_15 = arith.constant 0 : index
    %31 = vector.load %arg5[%c0_13, %c0_14, %c0_15] : memref<1x1x256xf32, #tpu.memory_space<vmem>>, vector<1x1x256xf32>
    %32 = vector.shape_cast %31 : vector<1x1x256xf32> to vector<1x256xf32>
    %33 = vector.shape_cast %30 : vector<1x256xf32> to vector<1x1x256xf32>
    tpu.vector_store %arg5[%c0_13, %c0_14, %c0_15], %33 {strides = array<i32>} : memref<1x1x256xf32, #tpu.memory_space<vmem>>, vector<1x1x256xf32>,
    return
  }
  func.func @transform_0(%arg0: i32, %arg1: i32) -> (i32, i32, i32) {
    %c0_i32 = arith.constant 0 : i32
    %c0_i32_0 = arith.constant 0 : i32
    return %arg0, %c0_i32, %arg1 : i32, i32, i32
  }
  func.func @transform_1(%arg0: i32, %arg1: i32) -> (i32, i32, i32) {
    %c0_i32 = arith.constant 0 : i32
    %c0_i32_0 = arith.constant 0 : i32
    return %arg0, %c0_i32, %arg1 : i32, i32, i32
  }
  func.func @transform_2(%arg0: i32, %arg1: i32) -> (i32, i32, i32) {
    %c0_i32 = arith.constant 0 : i32
    %c0_i32_0 = arith.constant 0 : i32
    return %arg0, %c0_i32, %arg1 : i32, i32, i32
  }
  func.func @transform_3(%arg0: i32, %arg1: i32) -> (i32, i32, i32) {
    %c0_i32 = arith.constant 0 : i32
    %c0_i32_0 = arith.constant 0 : i32
    return %arg0, %c0_i32, %arg1 : i32, i32, i32
  }
}

</mosaic_0001>

<llo_original>
// kernel: tpu_custom_call.1
$region0: #{tpu_custom_call.1}
  #allocation0 [shape = 'u32[]', space=smem, size = 0x4, offset = 0x4, fixed_abs, tag = 'smem constant byte address 0x4 - core index']
  #allocation1 [shape = 'u32[144,128]{1,0:T(1,128)}', space=vmem, size = 0x12000, scoped, tag = 'internal scratch']
  %s0 = inlined_call_operand.vmem [shape: f32[2,19,256], index: 0, kind: input, shape index: {}]
  %s1 = inlined_call_operand.vmem [shape: s32[2,1,256], index: 1, kind: input, shape index: {}]
  %s2 = inlined_call_operand.hbm [shape: f32[2,1,256], index: 2, kind: output, shape index: {0}]
  %s3 = inlined_call_operand.hbm [shape: f32[2,1,256], index: 3, kind: output, shape index: {1}]
  %4 = xla_tuple %s2, %s3
  %s5 = sld [smem:[#allocation0]]
  $region49: #{tpu_custom_call.1} parent=0
    _
  %s7 = ssub.s32 1, %s5
  %s8 = scalar_select 0, %s7, %s5
  $region1: #{tpu_custom_call.1} parent=0
    #allocation2 [shape = 'u8[2048]{0}', space=vmem, size = 0x800, scoped, tag = 'output window, operand 0']
    #allocation3 [shape = 's32[2]{0}', space=sflag, size = 0x8, scoped, tag = 'scoped memory for tpu_custom_call.1']
    #allocation4 [shape = 'u8[2048]{0}', space=vmem, size = 0x800, scoped, tag = 'output window, operand 1']
    #allocation5 [shape = 's32[2]{0}', space=sflag, size = 0x8, scoped, tag = 'scoped memory for tpu_custom_call.1']
    %9 = vsyncpa [#allocation3], 0
    %s10 = scalar_lea.sflag [#allocation3], 1
    %11 = vsyncpa %s10, 0
    %12 = vsyncpa [#allocation5], 0
    %s13 = scalar_lea.sflag [#allocation5], 1
    %14 = vsyncpa %s13, 0
    loop: start=0, step=1, limit=4
    $region2: #{tpu_custom_call.1} parent=1 // loop_pre_header
      _
    $region3: #{tpu_custom_call.1} parent=1 // loop_header
      %s16 = sphi 0, %s20
      %p17 = scmp.ge.s32.totalorder %s16, 4
      %s23 = sphi 0, %s35
      %s24 = sphi 0, %s31
      %s25 = sphi 0, %s23
      %s26 = sphi 0, %s24
      %s27 = sphi 0, %s25
      %s28 = sphi 0, %s26
      %s40 = sphi 0, %s42
      %s43 = sphi 0, %s40
      %s44 = sphi 0, %s43
      %s60 = sphi 0, %s44
      %s68 = sphi 0, %s70
      %s71 = sphi 0, %s68
      %s72 = sphi 0, %s71
      %s88 = sphi 0, %s72
      %s96 = sphi 0, %s98
      %s99 = sphi 0, %s96
      %s100 = sphi 0, %s99
      %s116 = sphi 0, %s100
      %s124 = sphi 0, %s126
      %s127 = sphi 0, %s124
      %s128 = sphi 0, %s127
      %s144 = sphi 0, %s128
    $region4: #{tpu_custom_call.1} parent=1 // loop_header_branch
      %19 = sbr.rel (%p17) target = $region8
    $region5: #{tpu_custom_call.1} parent=1 // loop_body
      %s21 = ssub.s32 %s16, 1
      %s22 = ssub.s32 %s16, 2
      %s29 = sadd.s32 1, %s24
      %p30 = scmp.ge.s32.totalorder %s29, 1
      %s31 = scalar_select %p30, 0, %s29
      %s32 = sadd.s32 1, %s23
      %s33 = scalar_select %p30, %s32, %s23
      %p34 = scmp.ge.s32.totalorder %s33, 2
      %s35 = scalar_select %p34, 0, %s33
      %s36 = ssub.s32 %s23, %s35
      %s37 = ssub.s32 %s24, %s31
      %s38 = sor.u32 %s36, %s37
      %p39 = scmp.eq.s32.totalorder %s38, 0
      %s41 = sadd.s32 %s40, 1
      %s42 = scalar_select %p39, %s40, %s41
      %p45 = pneg %p39
      %p46 = scmp.eq.s32.totalorder %s16, 1
      %p47 = por %p45, %p46
      %p48 = scmp.ne.s32.totalorder %s40, %s43
      %p49 = scmp.eq.s32.totalorder %s16, 0
      %p50 = por %p48, %p49
      %p51 = scmp.ne.s32.totalorder %s40, %s43
      %p52 = scmp.eq.s32.totalorder %s21, 1
      %p53 = por %p51, %p52
      %p54 = scmp.ne.s32.totalorder %s43, %s44
      %p55 = scmp.eq.s32.totalorder %s21, 0
      %p56 = por %p54, %p55
      %p57 = scmp.ne.s32.totalorder %s43, %s44
      %p58 = scmp.eq.s32.totalorder %s22, 1
      %p59 = por %p57, %p58
      %p61 = scmp.ne.s32.totalorder %s44, %s60
      %p62 = scmp.eq.s32.totalorder %s22, 0
      %p63 = por %p61, %p62
      %s64 = ssub.s32 %s23, %s35
      %s65 = ssub.s32 %s24, %s31
      %s66 = sor.u32 %s64, %s65
      %p67 = scmp.eq.s32.totalorder %s66, 0
      %s69 = sadd.s32 %s68, 1
      %s70 = scalar_select %p67, %s68, %s69
      %p73 = pneg %p67
      %p74 = scmp.eq.s32.totalorder %s16, 1
      %p75 = por %p73, %p74
      %p76 = scmp.ne.s32.totalorder %s68, %s71
      %p77 = scmp.eq.s32.totalorder %s16, 0
      %p78 = por %p76, %p77
      %p79 = scmp.ne.s32.totalorder %s68, %s71
      %p80 = scmp.eq.s32.totalorder %s21, 1
      %p81 = por %p79, %p80
      %p82 = scmp.ne.s32.totalorder %s71, %s72
      %p83 = scmp.eq.s32.totalorder %s21, 0
      %p84 = por %p82, %p83
      %p85 = scmp.ne.s32.totalorder %s71, %s72
      %p86 = scmp.eq.s32.totalorder %s22, 1
      %p87 = por %p85, %p86
      %p89 = scmp.ne.s32.totalorder %s72, %s88
      %p90 = scmp.eq.s32.totalorder %s22, 0
      %p91 = por %p89, %p90
      %s92 = ssub.s32 %s23, %s35
      %s93 = ssub.s32 %s24, %s31
      %s94 = sor.u32 %s92, %s93
      %p95 = scmp.eq.s32.totalorder %s94, 0
      %s97 = sadd.s32 %s96, 1
      %s98 = scalar_select %p95, %s96, %s97
      %p101 = pneg %p95
      %p102 = scmp.eq.s32.totalorder %s16, 1
      %p103 = por %p101, %p102
      %p104 = scmp.ne.s32.totalorder %s96, %s99
      %p105 = scmp.eq.s32.totalorder %s16, 0
      %p106 = por %p104, %p105
      %p107 = scmp.ne.s32.totalorder %s96, %s99
      %p108 = scmp.eq.s32.totalorder %s21, 1
      %p109 = por %p107, %p108
      %p110 = scmp.ne.s32.totalorder %s99, %s100
      %p111 = scmp.eq.s32.totalorder %s21, 0
      %p112 = por %p110, %p111
      %p113 = scmp.ne.s32.totalorder %s99, %s100
      %p114 = scmp.eq.s32.totalorder %s22, 1
      %p115 = por %p113, %p114
      %p117 = scmp.ne.s32.totalorder %s100, %s116
      %p118 = scmp.eq.s32.totalorder %s22, 0
      %p119 = por %p117, %p118
      %s120 = ssub.s32 %s23, %s35
      %s121 = ssub.s32 %s24, %s31
      %s122 = sor.u32 %s120, %s121
      %p123 = scmp.eq.s32.totalorder %s122, 0
      %s125 = sadd.s32 %s124, 1
      %s126 = scalar_select %p123, %s124, %s125
      %p129 = pneg %p123
      %p130 = scmp.eq.s32.totalorder %s16, 1
      %p131 = por %p129, %p130
      %p132 = scmp.ne.s32.totalorder %s124, %s127
      %p133 = scmp.eq.s32.totalorder %s16, 0
      %p134 = por %p132, %p133
      %p135 = scmp.ne.s32.totalorder %s124, %s127
      %p136 = scmp.eq.s32.totalorder %s21, 1
      %p137 = por %p135, %p136
      %p138 = scmp.ne.s32.totalorder %s127, %s128
      %p139 = scmp.eq.s32.totalorder %s21, 0
      %p140 = por %p138, %p139
      %p141 = scmp.ne.s32.totalorder %s127, %s128
      %p142 = scmp.eq.s32.totalorder %s22, 1
      %p143 = por %p141, %p142
      %p145 = scmp.ne.s32.totalorder %s128, %s144
      %p146 = scmp.eq.s32.totalorder %s22, 0
      %p147 = por %p145, %p146
      %p148 = scmp.le.s32.totalorder 1, %s16
      %p149 = scmp.lt.s32.totalorder %s16, 3
      %p150 = pnand %p148, %p149
      %p151 = pneg %p150
      // Predicated region
      $region9: #{tpu_custom_call.1} parent=5 // pred_check
        _
      $region10: #{tpu_custom_call.1} parent=5 // pred_check_branch
        %153 = sbr.rel (%p150) target = $region12
      $region11: #{tpu_custom_call.1} parent=5 // pred_region
        %s154 = ssub.s32 %s16, 1
      $region12: #{tpu_custom_call.1} parent=5 // pred_fallthru
        _
      %p155 = scmp.lt.s32.totalorder %s16, 2
      // Predicated region
      $region13: #{tpu_custom_call.1} parent=5 // pred_check
        %p156 = pneg %p155
      $region14: #{tpu_custom_call.1} parent=5 // pred_check_branch
        %158 = sbr.rel (%p156) target = $region16
      $region15: #{tpu_custom_call.1} parent=5 // pred_region
        // Predicated region
        $region17: #{tpu_custom_call.1} parent=15 // pred_check
          %p159 = pneg %p50
        $region18: #{tpu_custom_call.1} parent=15 // pred_check_branch
          %161 = sbr.rel (%p159) target = $region20
        $region19: #{tpu_custom_call.1} parent=15 // pred_region
          %s162 = smul.u32 2, %s24
          %p163 = scmp.lt.s32.totalorder %s23, 1
          %s164 = scalar_select %p163, %s23, 1
          %p165 = scmp.lt.s32.totalorder %s162, 1
          %s166 = scalar_select %p165, %s162, 1
          %s167 = smul.addr %s164, 6
          %s168 = sadd.s32 %s166, %s167
          %s169 = smul.addr %s168, 8
          %s170 = scalar_lea.vmem %s0, %s169
          %s171 = smul.u32 2, %s24
        $region20: #{tpu_custom_call.1} parent=15 // pred_fallthru
          _
        // Predicated region
        $region21: #{tpu_custom_call.1} parent=15 // pred_check
          %p172 = pneg %p78
        $region22: #{tpu_custom_call.1} parent=15 // pred_check_branch
          %174 = sbr.rel (%p172) target = $region24
        $region23: #{tpu_custom_call.1} parent=15 // pred_region
          %s175 = smul.u32 2, %s24
          %p176 = scmp.lt.s32.totalorder %s23, 1
          %s177 = scalar_select %p176, %s23, 1
          %p178 = scmp.lt.s32.totalorder %s175, 1
          %s179 = scalar_select %p178, %s175, 1
          %s180 = smul.addr %s177, 2
          %s181 = sadd.s32 %s179, %s180
          %s182 = scalar_lea.vmem %s1, %s181
          %s183 = smul.u32 2, %s24
        $region24: #{tpu_custom_call.1} parent=15 // pred_fallthru
          _
      $region16: #{tpu_custom_call.1} parent=5 // pred_fallthru
        _
      %p184 = scmp.le.s32.totalorder 1, %s16
      %p185 = scmp.lt.s32.totalorder %s16, 3
      %p186 = pnand %p184, %p185
      %p187 = pneg %p186
      // Predicated region
      $region25: #{tpu_custom_call.1} parent=5 // pred_check
        _
      $region26: #{tpu_custom_call.1} parent=5 // pred_check_branch
        %189 = sbr.rel (%p186) target = $region28
      $region27: #{tpu_custom_call.1} parent=5 // pred_region
        %s190 = ssub.s32 %s16, 1
        %s191 = smul.u32 2, %s26
        %p192 = scmp.lt.s32.totalorder %s25, 1
        %s193 = scalar_select %p192, %s25, 1
        %p194 = scmp.lt.s32.totalorder %s191, 1
        %s195 = scalar_select %p194, %s191, 1
        %s196 = smul.addr %s193, 6
        %s197 = sadd.s32 %s195, %s196
        %s198 = smul.addr %s197, 8
        %s199 = scalar_lea.vmem %s0, %s198
        %p200 = pneg %p56
        %p201 = pneg %p53
        %s202 = smul.u32 2, %s26
        %p203 = scmp.lt.s32.totalorder %s25, 1
        %s204 = scalar_select %p203, %s25, 1
        %p205 = scmp.lt.s32.totalorder %s202, 1
        %s206 = scalar_select %p205, %s202, 1
        %s207 = smul.addr %s204, 2
        %s208 = sadd.s32 %s206, %s207
        %s209 = scalar_lea.vmem %s1, %s208
        %p210 = pneg %p84
        %p211 = pneg %p81
        %p212 = pneg %p112
        %p213 = pneg %p109
        %s214 = sand.u32 %s99, 1
        %s215 = scalar_lea.sflag [#allocation3], %s214
        %s216 = sand.u32 %s99, 1
        %s217 = smul.addr %s216, 2
        %s218 = scalar_lea.vmem [#allocation2], %s217
        %p219 = pneg %p140
        %p220 = pneg %p137
        %s221 = sand.u32 %s127, 1
        %s222 = scalar_lea.sflag [#allocation5], %s221
        %s223 = sand.u32 %s127, 1
        %s224 = smul.addr %s223, 2
        %s225 = scalar_lea.vmem [#allocation4], %s224
        %s226 = smul.u32 2, %s26
        %p227 = scmp.lt.s32.totalorder %s25, 1
        %s228 = scalar_select %p227, %s25, 1
        %p229 = scmp.lt.s32.totalorder %s226, 1
        %s230 = scalar_select %p229, %s226, 1
        %s231 = smul.addr %s228, 6
        %s232 = sadd.s32 %s230, %s231
        %s233 = smul.addr %s232, 8
        %s234 = scalar_lea.vmem %s0, %s233
        %s235 = smul.u32 2, %s26
        %s236 = smul.u32 2, %s26
        %p237 = scmp.lt.s32.totalorder %s25, 1
        %s238 = scalar_select %p237, %s25, 1
        %p239 = scmp.lt.s32.totalorder %s236, 1
        %s240 = scalar_select %p239, %s236, 1
        %s241 = smul.addr %s238, 2
        %s242 = sadd.s32 %s240, %s241
        %s243 = scalar_lea.vmem %s1, %s242
        %s244 = smul.u32 2, %s26
        %s245 = smul.u32 2, %s26
        %s246 = smul.u32 2, %s26
        %v247 = vld [vmem:[%s234] sm:$0xff]
        %v248 = vld [vmem:[%s234 + $0x8] sm:$0xff]
        %v249 = vld [vmem:[%s234 + $0x10] sm:$0xff]
        %v250 = vld [vmem:[%s234 + $0x18] sm:$0xff]
        %v251 = vld [vmem:[%s234 + $0x20] sm:$0x7]
        %v252 = vld [vmem:[%s234 + $0x28] sm:$0x7]
        %v253 = vld [vmem:[%s243] sm:$0x3]
        %v254 = vlaneseq
        %v255 = vshrl.u32 %v254, 7
        %v256 = vadd.s32 %v255, 8
        %v257 = vadd.s32 %v255, 16
        %v258 = vlaneseq
        %v259 = vshrl.u32 %v258, 7
        %v260 = vsub.s32 0, %v259
        %v261 = vrot.slane %v253, %v260
        %v262 = vlaneseq
        %v263 = vshrl.u32 %v262, 7
        %v264 = vsub.s32 1, %v263
        %v265 = vrot.slane %v253, %v264
        %vm266 = vcmp.eq.s32.totalorder %v255, %v261
        %vm267 = vcmp.eq.s32.totalorder %v255, %v265
        %vm268 = vcmp.eq.s32.totalorder %v256, %v261
        %vm269 = vcmp.eq.s32.totalorder %v256, %v265
        %vm270 = vcmp.eq.s32.totalorder %v257, %v261
        %vm271 = vcmp.eq.s32.totalorder %v257, %v265
        %vm272 = vcmask 1042432
        %v273 = vsel %vm272, %v251, -inf
        %v274 = vmax.f32 %v247, %v273
        %v275 = vmax.f32 %v274, %v249
        %v276 = vrot.slane %v275, 4
        %v277 = vmax.f32 %v275, %v276
        %v278 = vrot.slane %v277, 2
        %v279 = vmax.f32 %v277, %v278
        %v280 = vrot.slane %v279, 1
        %v281 = vmax.f32 %v279, %v280
        %v282 = vsel %vm272, %v252, -inf
        %v283 = vmax.f32 %v248, %v282
        %v284 = vmax.f32 %v283, %v250
        %v285 = vrot.slane %v284, 4
        %v286 = vmax.f32 %v284, %v285
        %v287 = vrot.slane %v286, 2
        %v288 = vmax.f32 %v286, %v287
        %v289 = vrot.slane %v288, 1
        %v290 = vmax.f32 %v288, %v289
        %v291 = vsub.f32 %v247, %v281
        %v292 = vsub.f32 %v248, %v290
        %v293 = vsub.f32 %v249, %v281
        %v294 = vsub.f32 %v250, %v290
        %v295 = vsub.f32 %v251, %v281
        %v296 = vsub.f32 %v252, %v290
        %v297 = vmul.f32 %v291, 1.442695
        %v298 = vpow.pop %v297
        %v299 = vmul.f32 %v292, 1.442695
        %v300 = vpow.pop %v299
        %v301 = vmul.f32 %v293, 1.442695
        %v302 = vpow.pop %v301
        %v303 = vmul.f32 %v294, 1.442695
        %v304 = vpow.pop %v303
        %v305 = vmul.f32 %v295, 1.442695
        %v306 = vpow.pop %v305
        %v307 = vmul.f32 %v296, 1.442695
        %v308 = vpow.pop %v307
        %v309 = vadd.f32 %v298, %v302
        %v310 = vsel %vm272, %v306, 0.0
        %v311 = vadd.f32 %v309, %v310
        %v312 = vrot.slane %v311, 4
        %v313 = vadd.f32 %v311, %v312
        %v314 = vrot.slane %v313, 2
        %v315 = vadd.f32 %v313, %v314
        %v316 = vrot.slane %v315, 1
        %v317 = vadd.f32 %v315, %v316
        %v318 = vadd.f32 %v300, %v304
        %v319 = vsel %vm272, %v308, 0.0
        %v320 = vadd.f32 %v318, %v319
        %v321 = vrot.slane %v320, 4
        %v322 = vadd.f32 %v320, %v321
        %v323 = vrot.slane %v322, 2
        %v324 = vadd.f32 %v322, %v323
        %v325 = vrot.slane %v324, 1
        %v326 = vadd.f32 %v324, %v325
        %v327 = vlog2.pop %v317
        %v328 = vmul.f32 %v327, 0.6931472
        %v329 = vlog2.pop %v326
        %v330 = vmul.f32 %v329, 0.6931472
        %v331 = vsel %vm266, %v291, 0.0
        %v332 = vsel %vm267, %v292, 0.0
        %v333 = vsel %vm268, %v293, 0.0
        %v334 = vsel %vm269, %v294, 0.0
        %v335 = vsel %vm270, %v295, 0.0
        %v336 = vsel %vm271, %v296, 0.0
        %v337 = vadd.f32 %v331, %v333
        %v338 = vsel %vm272, %v335, 0.0
        %v339 = vadd.f32 %v337, %v338
        %v340 = vrot.slane %v339, 4
        %v341 = vadd.f32 %v339, %v340
        %v342 = vrot.slane %v341, 2
        %v343 = vadd.f32 %v341, %v342
        %v344 = vrot.slane %v343, 1
        %v345 = vadd.f32 %v343, %v344
        %v346 = vadd.f32 %v332, %v334
        %v347 = vsel %vm272, %v336, 0.0
        %v348 = vadd.f32 %v346, %v347
        %v349 = vrot.slane %v348, 4
        %v350 = vadd.f32 %v348, %v349
        %v351 = vrot.slane %v350, 2
        %v352 = vadd.f32 %v350, %v351
        %v353 = vrot.slane %v352, 1
        %v354 = vadd.f32 %v352, %v353
        %v355 = vsub.f32 %v328, %v345
        %v356 = vsub.f32 %v330, %v354
        %v357 = vsub.f32 %v345, %v328
        %v358 = vsub.f32 %v354, %v330
        %v359 = vmul.f32 %v357, 1.442695
        %v360 = vpow.pop %v359
        %v361 = vmul.f32 %v358, 1.442695
        %v362 = vpow.pop %v361
        %vm363 = vcmp.ne.s32.totalorder %v253, 255
        %v366 = vcombine.low %v355, %v356
        %v368 = vunpack.c.l.s4 1966171168
        %v369 = vunpack.c.0.s8 %v368
        %v370 = vlaneseq
        %v371 = vshrl.u32 %v370, 7
        %v372 = vsub.s32 %v369, %v371
        %v373 = vrot.slane %v366, %v372
        %v375 = vunpack.c.l.s4 1966171168
        %v376 = vunpack.c.0.s8 %v375
        %v377 = vlaneseq
        %v378 = vshrl.u32 %v377, 7
        %v379 = vsub.s32 %v376, %v378
        %v380 = vrot.slane %v373, %v379
        %v382 = vsel %vm363, %v380, 0.0
        %v383 = vlaneseq
        %vm384 = vcmp.ge.s32.totalorder %v383, 0
        %vm385 = vcmp.lt.s32.totalorder %v383, 256
        %vm386 = vmand %vm384, %vm385
        %387 = vst.msk [vmem:[%s218] sm:$0x3] %vm386, %v382
        %v390 = vcombine.low %v360, %v362
        %v392 = vunpack.c.l.s4 1966171168
        %v393 = vunpack.c.0.s8 %v392
        %v394 = vlaneseq
        %v395 = vshrl.u32 %v394, 7
        %v396 = vsub.s32 %v393, %v395
        %v397 = vrot.slane %v390, %v396
        %v399 = vunpack.c.l.s4 1966171168
        %v400 = vunpack.c.0.s8 %v399
        %v401 = vlaneseq
        %v402 = vshrl.u32 %v401, 7
        %v403 = vsub.s32 %v400, %v402
        %v404 = vrot.slane %v397, %v403
        %v406 = vsel %vm363, %v404, inf
        %407 = vst.msk [vmem:[%s225] sm:$0x3] %vm386, %v406
        %s408 = sand.u32 %s99, 1
        %s409 = scalar_lea.sflag [#allocation3], %s408
        %s410 = sand.u32 %s99, 1
        %s411 = smul.addr %s410, 2
        %s412 = scalar_lea.vmem [#allocation2], %s411
        %s413 = sand.u32 %s127, 1
        %s414 = scalar_lea.sflag [#allocation5], %s413
        %s415 = sand.u32 %s127, 1
        %s416 = smul.addr %s415, 2
        %s417 = scalar_lea.vmem [#allocation4], %s416
        // Predicated region
        $region29: #{tpu_custom_call.1} parent=27 // pred_check
          %p418 = pneg %p109
        $region30: #{tpu_custom_call.1} parent=27 // pred_check_branch
          %420 = sbr.rel (%p418) target = $region32
        $region31: #{tpu_custom_call.1} parent=27 // pred_region
          %s421 = smul.u32 2, %s26
          %s423 = ssub.s32 32, 32
          %424 = vsyncadd %s409, %s423
          %s425 = smul.addr %s25, 2
          %s426 = sadd.s32 %s421, %s425
          %s427 = smul.addr %s426, 16
          %s428 = scalar_lea.hbm %s2, %s427
          %s430 = sshll.u32 %s412, 4
          %s431 = int_to_ptr.vmem [resolvable:$true] %s430
          %433 = dma.vmem_to_hbm [thread:$0]  %s431, 32, %s428, %s409
        $region32: #{tpu_custom_call.1} parent=27 // pred_fallthru
          _
        // Predicated region
        $region33: #{tpu_custom_call.1} parent=27 // pred_check
          %p434 = pneg %p137
        $region34: #{tpu_custom_call.1} parent=27 // pred_check_branch
          %436 = sbr.rel (%p434) target = $region36
        $region35: #{tpu_custom_call.1} parent=27 // pred_region
          %s437 = smul.u32 2, %s26
          %s439 = ssub.s32 32, 32
          %440 = vsyncadd %s414, %s439
          %s441 = smul.addr %s25, 2
          %s442 = sadd.s32 %s437, %s441
          %s443 = smul.addr %s442, 16
          %s444 = scalar_lea.hbm %s3, %s443
          %s446 = sshll.u32 %s417, 4
          %s447 = int_to_ptr.vmem [resolvable:$true] %s446
          %449 = dma.vmem_to_hbm [thread:$0]  %s447, 32, %s444, %s414
        $region36: #{tpu_custom_call.1} parent=27 // pred_fallthru
          _
      $region28: #{tpu_custom_call.1} parent=5 // pred_fallthru
        _
      %p450 = scmp.le.s32.totalorder 2, %s16
      // Predicated region
      $region37: #{tpu_custom_call.1} parent=5 // pred_check
        %p451 = pneg %p450
      $region38: #{tpu_custom_call.1} parent=5 // pred_check_branch
        %453 = sbr.rel (%p451) target = $region40
      $region39: #{tpu_custom_call.1} parent=5 // pred_region
        %s454 = ssub.s32 %s16, 2
        // Predicated region
        $region41: #{tpu_custom_call.1} parent=39 // pred_check
          %p455 = pneg %p115
        $region42: #{tpu_custom_call.1} parent=39 // pred_check_branch
          %457 = sbr.rel (%p455) target = $region44
        $region43: #{tpu_custom_call.1} parent=39 // pred_region
          %s458 = sand.u32 %s100, 1
          %s459 = scalar_lea.sflag [#allocation3], %s458
          %s460 = sand.u32 %s100, 1
          %s461 = smul.addr %s460, 2
          %s462 = scalar_lea.vmem [#allocation2], %s461
          %463 = dma.done %s459, 32
        $region44: #{tpu_custom_call.1} parent=39 // pred_fallthru
          _
        // Predicated region
        $region45: #{tpu_custom_call.1} parent=39 // pred_check
          %p464 = pneg %p143
        $region46: #{tpu_custom_call.1} parent=39 // pred_check_branch
          %466 = sbr.rel (%p464) target = $region48
        $region47: #{tpu_custom_call.1} parent=39 // pred_region
          %s467 = sand.u32 %s128, 1
          %s468 = scalar_lea.sflag [#allocation5], %s467
          %s469 = sand.u32 %s128, 1
          %s470 = smul.addr %s469, 2
          %s471 = scalar_lea.vmem [#allocation4], %s470
          %472 = dma.done %s468, 32
        $region48: #{tpu_custom_call.1} parent=39 // pred_fallthru
          _
      $region40: #{tpu_custom_call.1} parent=5 // pred_fallthru
        _
    $region6: #{tpu_custom_call.1} parent=1 // loop_footer
      %s20 = sadd.s32 1, %s16
    $region7: #{tpu_custom_call.1} parent=1 // loop_footer_branch
      %15 = sbr.rel target = $region3
    $region8: #{tpu_custom_call.1} parent=1 // loop_exit
      _
    %473 = vsyncpa [#allocation3], 1
    %s474 = scalar_lea.sflag [#allocation3], 1
    %475 = vsyncpa %s474, 1
    %476 = vsyncpa [#allocation5], 1
    %s477 = scalar_lea.sflag [#allocation5], 1
    %478 = vsyncpa %s477, 1

</llo_original>
